<compile_context>
chip_gen: v5e
topology: v5e:2x2
jax: 0.10.0
libtpu: 0.0.40
codegen_flags: <defaults>
</compile_context>

<pallas_src>
import jax
import jax.numpy as jnp
from jax import lax
from jax.experimental import pallas as pl
from jax.experimental.pallas import tpu as pltpu

ROW_ALIGN = 8                      # sublane alignment for the node axis
TN_MAX = 1 << 16                   # hard cap on node-tile rows
TARGET_X_BLOCK_BYTES = 4 << 20     # aim for ~4 MiB x blocks per grid step
VMEM_HEADROOM_BYTES = 8 << 20      # slack left for compiler temporaries


def _round_up(a, b):
    return ((a + b - 1) // b) * b


def _chip_config():
    """Returns (num_splits, vmem_cap_bytes) for the local TPU generation."""
    kind = ""
    try:
        kind = jax.devices()[0].device_kind.lower()
    except Exception:
        pass
    if "v7" in kind or "tpu7" in kind:
        # v7x: 2 TensorCores per chip, 64 MiB physical VMEM per core.
        return 2, 48 * 1024 * 1024
    if "v6" in kind or "v5e" in kind or "v5 lite" in kind:
        # v5e / v6e: single TensorCore, 128 MiB physical VMEM.
        return 1, 96 * 1024 * 1024
    # Unknown chip: stay conservative (single split, modest VMEM ask).
    return 1, 48 * 1024 * 1024


def _per_row_vmem_bytes(hidden, itemsize, num_graphs):
    """Per-node-row VMEM cost of one grid step.

    x block (double buffered):                       2 * hidden * itemsize
    batch (tn, 1) int32 block, lane-padded to 128
      lanes in VMEM, double buffered:                2 * 128 * 4
    allowance for fused (tn, B) temporaries
      (mask / select, lane padded to >= 128):        max(num_graphs, 128) * 4
    """
    return 2 * (hidden * itemsize + 128 * 4) + max(num_graphs, 128) * 4


def _pick_tile_rows(n_per_split, hidden, itemsize, num_graphs, vmem_cap):
    """Byte-targeted node-tile rows, clamped by VMEM budget and node count."""
    per_row = _per_row_vmem_bytes(hidden, itemsize, num_graphs)
    budget = max(vmem_cap - VMEM_HEADROOM_BYTES, 4 << 20)
    tn_budget = max(ROW_ALIGN, (budget // per_row) // ROW_ALIGN * ROW_ALIGN)
    tn_target = max(
        ROW_ALIGN,
        _round_up(TARGET_X_BLOCK_BYTES // max(hidden * itemsize, 1), ROW_ALIGN))
    tn = min(tn_target, tn_budget, TN_MAX)
    tn = min(tn, _round_up(max(n_per_split, 1), ROW_ALIGN))
    return max(ROW_ALIGN, tn)


def valuenet_kernel(batch_ref, x_ref, w_ref, sums_ref, cnts_ref):
    """One (split, node-tile) grid step of fused global_mean_pool + Linear(H->1).

    batch_ref: (TN, 1) int32      -- graph id per node (-1 for padding rows)
    x_ref:     (TN, H) f32/bf16   -- node features
    w_ref:     (1, H)  f32        -- linear weight row
    sums_ref:  (1, 1, B) f32      -- resident per-split segment sums of x @ w
    cnts_ref:  (1, 1, B) f32      -- resident per-split node counts per graph
    """
    k = pl.program_id(1)

    # P3: the output blocks are resident across the reduction axis k
    # (index_map is constant over k), so accumulate into them directly.
    @pl.when(k == 0)
    def _init():
        sums_ref[...] = jnp.zeros_like(sums_ref)
        cnts_ref[...] = jnp.zeros_like(cnts_ref)

    # Project first: per-node scalar on the VPU (mul) + XLU (lane reduce).
    # mean(x) @ w == mean(x @ w), so pooling the projected scalars is exact.
    x = x_ref[...].astype(jnp.float32)               # (TN, H)
    w = w_ref[...]                                   # (1, H) f32
    y = jnp.sum(x * w, axis=-1, keepdims=True)       # (TN, 1) f32

    tn = x.shape[0]
    num_graphs = sums_ref.shape[-1]
    batch_ids = batch_ref[...]                                    # (TN, 1)
    graph_ids = lax.broadcasted_iota(jnp.int32, (tn, num_graphs), 1)
    mask = graph_ids == batch_ids                                 # (TN, B) bool

    # Segment-sum of projected scalars + node counts (sublane reduces).
    # Padding rows carry graph id -1, match no graph, and contribute nothing.
    # NOTE: for very large num_graphs (B >~ H/4) this (TN, B) reduction could
    # be pushed onto the idle MXU via mask @ [y, 1]; not needed at these sizes.
    psum = jnp.sum(jnp.where(mask, y, 0.0), axis=0)               # (B,)
    pcnt = jnp.sum(mask.astype(jnp.float32), axis=0)              # (B,)
    sums_ref[...] += psum.reshape(sums_ref.shape)
    cnts_ref[...] += pcnt.reshape(cnts_ref.shape)


def _pallas_partials(batch2d, x, w2d, *, num_splits, tiles_per_split, tn,
                     hidden, num_graphs, vmem_limit, dim_sem):
    return pl.pallas_call(
        valuenet_kernel,
        out_shape=(
            jax.ShapeDtypeStruct((num_splits, 1, num_graphs), jnp.float32),
            jax.ShapeDtypeStruct((num_splits, 1, num_graphs), jnp.float32),
        ),
        grid_spec=pltpu.PrefetchScalarGridSpec(
            num_scalar_prefetch=0,
            grid=(num_splits, tiles_per_split),
            in_specs=[
                pl.BlockSpec((tn, 1),
                             lambda c, k: (c * tiles_per_split + k, 0)),
                pl.BlockSpec((tn, hidden),
                             lambda c, k: (c * tiles_per_split + k, 0)),
                pl.BlockSpec((1, hidden), lambda c, k: (0, 0)),
            ],
            out_specs=[
                pl.BlockSpec((1, 1, num_graphs), lambda c, k: (c, 0, 0)),
                pl.BlockSpec((1, 1, num_graphs), lambda c, k: (c, 0, 0)),
            ],
        ),
        compiler_params=pltpu.CompilerParams(
            dimension_semantics=dim_sem,
            vmem_limit_bytes=vmem_limit,
        ),
    )(batch2d, x, w2d)


def value_net_forward(x, edge_index_connections, edge_index_destinations,
                      batch, weight, bias, num_graphs):
    """ValueNet.forward: Linear(global_mean_pool(x, batch)).

    x:      (N, H) float32 or bfloat16
    batch:  (N,)   int, values in [0, num_graphs); out-of-range ids are dropped
    weight: (1, H) (PyTorch nn.Linear layout)
    bias:   (1,)
    returns (num_graphs, 1) float32
    """
    del edge_index_connections, edge_index_destinations  # unused in forward
    N, H = x.shape
    B = int(num_graphs)

    num_splits, vmem_cap = _chip_config()
    itemsize = x.dtype.itemsize
    n_per_split = -(-max(N, 1) // num_splits)
    tn = _pick_tile_rows(n_per_split, H, itemsize, B, vmem_cap)

    n_pad = _round_up(max(N, 1), num_splits * tn)
    tiles_per_split = n_pad // (num_splits * tn)

    batch_i32 = batch.astype(jnp.int32)
    if n_pad != N:
        x = jnp.pad(x, ((0, n_pad - N), (0, 0)))
        # Padding rows get graph id -1 -> they match no graph, contribute 0.
        batch_i32 = jnp.pad(batch_i32, (0, n_pad - N), constant_values=-1)
    batch2d = batch_i32.reshape(n_pad, 1)
    w2d = weight.reshape(1, H).astype(jnp.float32)

    # Scoped VMEM: actual double-buffer footprint + slack, capped per chip.
    footprint = tn * _per_row_vmem_bytes(H, itemsize, B) + (4 << 20)
    vmem_limit = int(min(vmem_cap, max(16 << 20, footprint)))

    if num_splits > 1:
        core_par = getattr(pltpu, "CORE_PARALLEL", "parallel")
        arb = getattr(pltpu, "ARBITRARY", "arbitrary")
        # Prefer CORE_PARALLEL (actually shards TensorCores on v7x); fall back
        # to the plain semantics that are known to lower everywhere.
        dim_sem_options = ((core_par, arb), ("parallel", "arbitrary"))
    else:
        dim_sem_options = (("arbitrary", "arbitrary"),)

    partials = None
    last_err = None
    for dim_sem in dim_sem_options:
        try:
            partials = _pallas_partials(
                batch2d, x, w2d, num_splits=num_splits,
                tiles_per_split=tiles_per_split, tn=tn, hidden=H,
                num_graphs=B, vmem_limit=vmem_limit, dim_sem=dim_sem)
            break
        except Exception as err:  # e.g. CORE_PARALLEL unsupported on this chip
            last_err = err
    if partials is None:
        raise last_err
    partial_sums, partial_cnts = partials

    # Tiny cross-split combine + mean + bias (a few B-sized XLA ops).
    sums = partial_sums.sum(axis=0)                    # (1, B)
    cnts = partial_cnts.sum(axis=0)                    # (1, B)
    pooled = sums / jnp.maximum(cnts, 1.0)             # empty graph -> 0 -> bias
    out = pooled + bias.reshape(1, 1).astype(jnp.float32)
    return out.reshape(B, 1)


def _reference(x, batch, weight, bias, num_graphs):
    """Pure-JAX reference of global_mean_pool + Linear for verification."""
    xf = x.astype(jnp.float32)
    sums = jax.ops.segment_sum(xf, batch, num_segments=num_graphs)
    counts = jax.ops.segment_sum(jnp.ones((x.shape[0],), jnp.float32), batch,
                                 num_segments=num_graphs)
    pooled = sums / jnp.maximum(counts[:, None], 1.0)
    return pooled @ weight.astype(jnp.float32).T + bias.astype(jnp.float32)


if __name__ == "__main__":
    key = jax.random.PRNGKey(0)
    k_x, k_w, k_b = jax.random.split(key, 3)

    # Small shapes: 8 nodes, hidden=32, 2 graphs (4 nodes each).
    N, H, B = 8, 32, 2
    x = jax.random.normal(k_x, (N, H), dtype=jnp.float32)
    batch = jnp.array([0, 0, 0, 0, 1, 1, 1, 1], dtype=jnp.int32)

    # Dummy edge tensors (unused by forward, shape (2, E)).
    edge_index_connections = jnp.zeros((2, 4), dtype=jnp.int32)
    edge_index_destinations = jnp.zeros((2, 4), dtype=jnp.int32)

    # Deterministic nn.Linear(H, 1) init: U(-1/sqrt(H), 1/sqrt(H)).
    bound = 1.0 / jnp.sqrt(jnp.float32(H))
    weight = jax.random.uniform(k_w, (1, H), jnp.float32, -bound, bound)
    bias = jax.random.uniform(k_b, (1,), jnp.float32, -bound, bound)

    # f32 path.
    out = value_net_forward(x, edge_index_connections, edge_index_destinations,
                            batch, weight, bias, num_graphs=B)
    out = jax.block_until_ready(out)
    ref = _reference(x, batch, weight, bias, B)
    assert out.shape == (B, 1), out.shape
    assert jnp.allclose(out, ref, atol=1e-5, rtol=1e-5), (out, ref)

    # bf16 path: x fed in native dtype (halves HBM traffic), accumulation in
    # f32; compare against a reference on the same bf16-quantised values.
    x_bf16 = x.astype(jnp.bfloat16)
    out_bf = value_net_forward(x_bf16, edge_index_connections,
                               edge_index_destinations, batch, weight, bias,
                               num_graphs=B)
    out_bf = jax.block_until_ready(out_bf)
    ref_bf = _reference(x_bf16.astype(jnp.float32), batch, weight, bias, B)
    assert jnp.allclose(out_bf, ref_bf, atol=1e-2, rtol=1e-2), (out_bf, ref_bf)

    print("KERNEL_OK")
</pallas_src>

<mosaic_0001>
module attributes {stable_mosaic.version = 11 : i64} {
  func.func @valuenet_kernel(%arg0: i32, %arg1: i32, %arg2: memref<8x1xi32, #tpu.memory_space<vmem>>, %arg3: memref<8x32xf32, #tpu.memory_space<vmem>>, %arg4: memref<1x32xf32, #tpu.memory_space<vmem>>, %arg5: memref<1x1x2xf32, #tpu.memory_space<vmem>>, %arg6: memref<1x1x2xf32, #tpu.memory_space<vmem>>) attributes {dimension_semantics = [#tpu.dimension_semantics<arbitrary>, #tpu.dimension_semantics<arbitrary>], iteration_bounds = array<i64: 1, 1>, scalar_prefetch = 0 : i64, scratch_operands = 0 : i64, tpu.core_type = #tpu.core_type<tc>, window_params = [{transform_indices = @transform_0, window_bounds = array<i64: 8, 1>}, {transform_indices = @transform_1, window_bounds = array<i64: 8, 32>}, {pipeline_mode = #tpu.pipeline_mode<synchronous>, transform_indices = @transform_2, window_bounds = array<i64: 1, 32>}, {transform_indices = @transform_3, window_bounds = array<i64: 1, 1, 2>}, {transform_indices = @transform_4, window_bounds = array<i64: 1, 1, 2>}]} {
    %c0_i32 = arith.constant 0 : i32
    %0 = arith.cmpi eq, %arg1, %c0_i32 : i32
    %1 = arith.extui %0 : i1 to i32
    %c0_i32_0 = arith.constant 0 : i32
    %2 = arith.cmpi ne, %1, %c0_i32_0 : i32
    scf.if %2 {
      %cst_21 = arith.constant 0.000000e+00 : f32
      %29 = vector.broadcast %cst_21 : f32 to vector<1x1x2xf32>
      %c0_22 = arith.constant 0 : index
      %c0_23 = arith.constant 0 : index
      %c0_24 = arith.constant 0 : index
      %30 = vector.load %arg5[%c0_22, %c0_23, %c0_24] : memref<1x1x2xf32, #tpu.memory_space<vmem>>, vector<1x1x2xf32>
      tpu.vector_store %arg5[%c0_22, %c0_23, %c0_24], %29 {strides = array<i32>} : memref<1x1x2xf32, #tpu.memory_space<vmem>>, vector<1x1x2xf32>,
      %cst_25 = arith.constant 0.000000e+00 : f32
      %31 = vector.broadcast %cst_25 : f32 to vector<1x1x2xf32>
      %c0_26 = arith.constant 0 : index
      %c0_27 = arith.constant 0 : index
      %c0_28 = arith.constant 0 : index
      %32 = vector.load %arg6[%c0_26, %c0_27, %c0_28] : memref<1x1x2xf32, #tpu.memory_space<vmem>>, vector<1x1x2xf32>
      tpu.vector_store %arg6[%c0_26, %c0_27, %c0_28], %31 {strides = array<i32>} : memref<1x1x2xf32, #tpu.memory_space<vmem>>, vector<1x1x2xf32>,
    } else {
    }
    %c0 = arith.constant 0 : index
    %c0_1 = arith.constant 0 : index
    %3 = vector.load %arg3[%c0, %c0_1] : memref<8x32xf32, #tpu.memory_space<vmem>>, vector<8x32xf32>
    %c0_2 = arith.constant 0 : index
    %c0_3 = arith.constant 0 : index
    %4 = vector.load %arg4[%c0_2, %c0_3] : memref<1x32xf32, #tpu.memory_space<vmem>>, vector<1x32xf32>
    %5 = vector.broadcast %4 : vector<1x32xf32> to vector<8x32xf32>
    %6 = arith.mulf %3, %5 : vector<8x32xf32>
    %cst = arith.constant dense<0.000000e+00> : vector<8xf32>
    %7 = vector.multi_reduction <add>, %6, %cst [1] : vector<8x32xf32> to vector<8xf32>
    %8 = vector.shape_cast %7 : vector<8xf32> to vector<8x1xf32>
    %c0_4 = arith.constant 0 : index
    %c0_5 = arith.constant 0 : index
    %9 = vector.load %arg2[%c0_4, %c0_5] : memref<8x1xi32, #tpu.memory_space<vmem>>, vector<8x1xi32>
    %10 = tpu.iota {dimensions = array<i32: 1>} : vector<8x2xi32>
    %11 = vector.broadcast %9 : vector<8x1xi32> to vector<8x2xi32>
    %12 = arith.cmpi eq, %10, %11 : vector<8x2xi32>
    %cst_6 = arith.constant 0.000000e+00 : f32
    %13 = vector.shape_cast %8 : vector<8x1xf32> to vector<8x1xf32>
    %14 = vector.broadcast %13 : vector<8x1xf32> to vector<8x2xf32>
    %15 = vector.broadcast %cst_6 : f32 to vector<8x2xf32>
    %16 = arith.select %12, %14, %15 : vector<8x2xi1>, vector<8x2xf32>
    %cst_7 = arith.constant dense<0.000000e+00> : vector<2xf32>
    %17 = vector.multi_reduction <add>, %16, %cst_7 [0] : vector<8x2xf32> to vector<2xf32>
    %18 = arith.extui %12 : vector<8x2xi1> to vector<8x2xi32>
    %19 = arith.sitofp %18 : vector<8x2xi32> to vector<8x2xf32>
    %cst_8 = arith.constant dense<0.000000e+00> : vector<2xf32>
    %20 = vector.multi_reduction <add>, %19, %cst_8 [0] : vector<8x2xf32> to vector<2xf32>
    %c0_9 = arith.constant 0 : index
    %c0_10 = arith.constant 0 : index
    %c0_11 = arith.constant 0 : index
    %21 = vector.load %arg5[%c0_9, %c0_10, %c0_11] : memref<1x1x2xf32, #tpu.memory_space<vmem>>, vector<1x1x2xf32>
    %22 = vector.shape_cast %17 : vector<2xf32> to vector<1x1x2xf32>
    %23 = arith.addf %21, %22 : vector<1x1x2xf32>
    %c0_12 = arith.constant 0 : index
    %c0_13 = arith.constant 0 : index
    %c0_14 = arith.constant 0 : index
    %24 = vector.load %arg5[%c0_12, %c0_13, %c0_14] : memref<1x1x2xf32, #tpu.memory_space<vmem>>, vector<1x1x2xf32>
    tpu.vector_store %arg5[%c0_12, %c0_13, %c0_14], %23 {strides = array<i32>} : memref<1x1x2xf32, #tpu.memory_space<vmem>>, vector<1x1x2xf32>,
    %c0_15 = arith.constant 0 : index
    %c0_16 = arith.constant 0 : index
    %c0_17 = arith.constant 0 : index
    %25 = vector.load %arg6[%c0_15, %c0_16, %c0_17] : memref<1x1x2xf32, #tpu.memory_space<vmem>>, vector<1x1x2xf32>
    %26 = vector.shape_cast %20 : vector<2xf32> to vector<1x1x2xf32>
    %27 = arith.addf %25, %26 : vector<1x1x2xf32>
    %c0_18 = arith.constant 0 : index
    %c0_19 = arith.constant 0 : index
    %c0_20 = arith.constant 0 : index
    %28 = vector.load %arg6[%c0_18, %c0_19, %c0_20] : memref<1x1x2xf32, #tpu.memory_space<vmem>>, vector<1x1x2xf32>
    tpu.vector_store %arg6[%c0_18, %c0_19, %c0_20], %27 {strides = array<i32>} : memref<1x1x2xf32, #tpu.memory_space<vmem>>, vector<1x1x2xf32>,
    return
  }
  func.func @transform_0(%arg0: i32, %arg1: i32) -> (i32, i32) {
    %c1_i32 = arith.constant 1 : i32
    %0 = arith.muli %arg0, %c1_i32 : i32
    %1 = arith.addi %0, %arg1 : i32
    %c0_i32 = arith.constant 0 : i32
    %c0_i32_0 = arith.constant 0 : i32
    return %1, %c0_i32 : i32, i32
  }
  func.func @transform_1(%arg0: i32, %arg1: i32) -> (i32, i32) {
    %c1_i32 = arith.constant 1 : i32
    %0 = arith.muli %arg0, %c1_i32 : i32
    %1 = arith.addi %0, %arg1 : i32
    %c0_i32 = arith.constant 0 : i32
    %c0_i32_0 = arith.constant 0 : i32
    return %1, %c0_i32 : i32, i32
  }
  func.func @transform_2(%arg0: i32, %arg1: i32) -> (i32, i32) {
    %c0_i32 = arith.constant 0 : i32
    %c0_i32_0 = arith.constant 0 : i32
    %c0_i32_1 = arith.constant 0 : i32
    return %c0_i32, %c0_i32_0 : i32, i32
  }
  func.func @transform_3(%arg0: i32, %arg1: i32) -> (i32, i32, i32) {
    %c0_i32 = arith.constant 0 : i32
    %c0_i32_0 = arith.constant 0 : i32
    %c0_i32_1 = arith.constant 0 : i32
    return %arg0, %c0_i32, %c0_i32_0 : i32, i32, i32
  }
  func.func @transform_4(%arg0: i32, %arg1: i32) -> (i32, i32, i32) {
    %c0_i32 = arith.constant 0 : i32
    %c0_i32_0 = arith.constant 0 : i32
    %c0_i32_1 = arith.constant 0 : i32
    return %arg0, %c0_i32, %c0_i32_0 : i32, i32, i32
  }
}

</mosaic_0001>

<llo_original>
// kernel: tpu_custom_call.1
$region0: #{tpu_custom_call.1}
  #allocation0 [shape = 'u32[]', space=smem, size = 0x4, offset = 0x4, fixed_abs, tag = 'smem constant byte address 0x4 - core index']
  #allocation1 [shape = 'u32[72,128]{1,0:T(1,128)}', space=vmem, size = 0x9000, scoped, tag = 'internal scratch']
  %s0 = inlined_call_operand.vmem [shape: s32[8,1], index: 0, kind: input, shape index: {}]
  %s1 = inlined_call_operand.vmem [shape: f32[8,32], index: 1, kind: input, shape index: {}]
  %s2 = inlined_call_operand.vmem [shape: f32[1,32], index: 2, kind: input, shape index: {}]
  %s3 = inlined_call_operand.hbm [shape: f32[1,1,2], index: 3, kind: output, shape index: {0}]
  %s4 = inlined_call_operand.hbm [shape: f32[1,1,2], index: 4, kind: output, shape index: {1}]
  %5 = xla_tuple %s3, %s4
  %s6 = sld [smem:[#allocation0]]
  $region34: #{tpu_custom_call.1} parent=0
    _
  %s8 = ssub.s32 1, %s6
  %s9 = scalar_select 0, %s8, %s6
  $region1: #{tpu_custom_call.1} parent=0
    #allocation2 [shape = 'u8[512]{0}', space=vmem, size = 0x400, scoped, tag = 'output window, operand 0, single buffered']
    #allocation3 [shape = 's32[1]{0}', space=sflag, size = 0x4, scoped, tag = 'scoped memory for tpu_custom_call.1']
    #allocation4 [shape = 'u8[512]{0}', space=vmem, size = 0x400, scoped, tag = 'output window, operand 1, single buffered']
    #allocation5 [shape = 's32[1]{0}', space=sflag, size = 0x4, scoped, tag = 'scoped memory for tpu_custom_call.1']
    %10 = vsyncpa [#allocation3], 0
    %11 = vsyncpa [#allocation5], 0
    // Predicated region
    $region2: #{tpu_custom_call.1} parent=1 // pred_check
      _
    $region3: #{tpu_custom_call.1} parent=1 // pred_check_branch
      %13 = sbr.rel (0) target = $region5
    $region4: #{tpu_custom_call.1} parent=1 // pred_region
      %s14 = sadd.s32 0, 0
      %p15 = scmp.lt.s32.totalorder %s14, 0
      %s16 = scalar_select %p15, %s14, 0
      %s17 = smul.addr %s16, 8
      %s18 = scalar_lea.vmem %s0, %s17
      %s19 = sadd.s32 0, 0
    $region5: #{tpu_custom_call.1} parent=1 // pred_fallthru
      _
    // Predicated region
    $region6: #{tpu_custom_call.1} parent=1 // pred_check
      _
    $region7: #{tpu_custom_call.1} parent=1 // pred_check_branch
      %21 = sbr.rel (0) target = $region9
    $region8: #{tpu_custom_call.1} parent=1 // pred_region
      %s22 = sadd.s32 0, 0
      %p23 = scmp.lt.s32.totalorder %s22, 0
      %s24 = scalar_select %p23, %s22, 0
      %s25 = smul.addr %s24, 8
      %s26 = scalar_lea.vmem %s1, %s25
      %s27 = sadd.s32 0, 0
    $region9: #{tpu_custom_call.1} parent=1 // pred_fallthru
      _
    // Predicated region
    $region10: #{tpu_custom_call.1} parent=1 // pred_check
      _
    $region11: #{tpu_custom_call.1} parent=1 // pred_check_branch
      %29 = sbr.rel (0) target = $region13
    $region12: #{tpu_custom_call.1} parent=1 // pred_region
      _
    $region13: #{tpu_custom_call.1} parent=1 // pred_fallthru
      _
    %s30 = sadd.s32 0, 0
    %p31 = scmp.lt.s32.totalorder %s30, 0
    %s32 = scalar_select %p31, %s30, 0
    %s33 = smul.addr %s32, 8
    %s34 = scalar_lea.vmem %s0, %s33
    %s35 = sadd.s32 0, 0
    %p36 = scmp.lt.s32.totalorder %s35, 0
    %s37 = scalar_select %p36, %s35, 0
    %s38 = smul.addr %s37, 8
    %s39 = scalar_lea.vmem %s1, %s38
    %s40 = sadd.s32 0, 0
    %p41 = scmp.lt.s32.totalorder %s40, 0
    %s42 = scalar_select %p41, %s40, 0
    %s43 = smul.addr %s42, 8
    %s44 = scalar_lea.vmem %s0, %s43
    %s45 = sadd.s32 0, 0
    %s46 = sadd.s32 0, 0
    %p47 = scmp.lt.s32.totalorder %s46, 0
    %s48 = scalar_select %p47, %s46, 0
    %s49 = smul.addr %s48, 8
    %s50 = scalar_lea.vmem %s1, %s49
    %s51 = sadd.s32 0, 0
    %p52 = scmp.eq.s32.totalorder 0, 0
    // Predicated region
    $region14: #{tpu_custom_call.1} parent=1 // pred_check
      %p53 = pneg %p52
    $region15: #{tpu_custom_call.1} parent=1 // pred_check_branch
      %55 = sbr.rel (%p53) target = $region17
    $region16: #{tpu_custom_call.1} parent=1 // pred_region
      %vm56 = vcmask 8192
      %57 = vst.msk [vmem:[#allocation2] sm:$0x1] %vm56, 0.0
      %58 = vst.msk [vmem:[#allocation4] sm:$0x1] %vm56, 0.0
    $region17: #{tpu_custom_call.1} parent=1 // pred_fallthru
      _
    %v59 = vld [vmem:[%s50] sm:$0xff]
    %v60 = vld [vmem:[%s2] sm:$0x1]
    %v62 = vperm.slane %v60, 0
    %v64 = vmul.f32 %v59, %v62
    %vm65 = vcmask 261120
    %v66 = vsel %vm65, %v64, 0.0
    %67 = vadd.xlane.f32.xlu0 %v66
    %v68 = vpop.xlane.xlu0 %67
    %v69 = vld [vmem:[%s44] sm:$0xff]
    %v70 = vlaneseq
    %v71 = vand.u32 %v70, 127
    %72 = vset.pattern.permute.xlu0 0
    %73 = vperm.xlu0 %72, %v69
    %v74 = vpop.permute.xlu0 %73
    %vm75 = vcmp.eq.s32.totalorder %v71, %v74
    %v76 = vsel %vm75, %v68, 0.0
    %vm77 = vcmask 15360
    %v78 = vsel %vm77, %v76, 0.0
    %v79 = vrot.slane %v78, 4
    %v80 = vadd.f32 %v78, %v79
    %v81 = vrot.slane %v80, 2
    %v82 = vadd.f32 %v80, %v81
    %v83 = vrot.slane %v82, 1
    %v84 = vadd.f32 %v82, %v83
    %v85 = vsel %vm75, 1, 0
    %v86 = vcvt.s32.f32 %v85
    %v87 = vsel %vm77, %v86, 0.0
    %v88 = vrot.slane %v87, 4
    %v89 = vadd.f32 %v87, %v88
    %v90 = vrot.slane %v89, 2
    %v91 = vadd.f32 %v89, %v90
    %v92 = vrot.slane %v91, 1
    %v93 = vadd.f32 %v91, %v92
    %v94 = vld [vmem:[#allocation2] sm:$0x1]
    %v95 = vadd.f32 %v94, %v84
    %vm96 = vcmask 8192
    %97 = vst.msk [vmem:[#allocation2] sm:$0x1] %vm96, %v95
    %v98 = vld [vmem:[#allocation4] sm:$0x1]
    %v99 = vadd.f32 %v98, %v93
    %100 = vst.msk [vmem:[#allocation4] sm:$0x1] %vm96, %v99
    // Predicated region
    $region18: #{tpu_custom_call.1} parent=1 // pred_check
      _
    $region19: #{tpu_custom_call.1} parent=1 // pred_check_branch
      %102 = sbr.rel (0) target = $region21
    $region20: #{tpu_custom_call.1} parent=1 // pred_region
      %104 = vsyncadd [#allocation3], 0
      %s106 = sshll.u32 [#allocation2], 4
      %s107 = int_to_ptr.vmem [resolvable:$true] %s106
      %s108 = sshll.u32 %s3, 4
      %s109 = int_to_ptr.hbm [resolvable:$true] %s108
      %111 = dma.vmem_to_hbm [thread:$0]  %s107, 16, %s109, [#allocation3]
    $region21: #{tpu_custom_call.1} parent=1 // pred_fallthru
      _
    // Predicated region
    $region22: #{tpu_custom_call.1} parent=1 // pred_check
      _
    $region23: #{tpu_custom_call.1} parent=1 // pred_check_branch
      %113 = sbr.rel (0) target = $region25
    $region24: #{tpu_custom_call.1} parent=1 // pred_region
      %115 = vsyncadd [#allocation5], 0
      %s117 = sshll.u32 [#allocation4], 4
      %s118 = int_to_ptr.vmem [resolvable:$true] %s117
      %s119 = sshll.u32 %s4, 4
      %s120 = int_to_ptr.hbm [resolvable:$true] %s119
      %122 = dma.vmem_to_hbm [thread:$0]  %s118, 16, %s120, [#allocation5]
    $region25: #{tpu_custom_call.1} parent=1 // pred_fallthru
      _
    // Predicated region
    $region26: #{tpu_custom_call.1} parent=1 // pred_check
      _
    $region27: #{tpu_custom_call.1} parent=1 // pred_check_branch
      %124 = sbr.rel (0) target = $region29
    $region28: #{tpu_custom_call.1} parent=1 // pred_region
      %126 = dma.done [#allocation3], 16
    $region29: #{tpu_custom_call.1} parent=1 // pred_fallthru
      _
    // Predicated region
    $region30: #{tpu_custom_call.1} parent=1 // pred_check
      _
    $region31: #{tpu_custom_call.1} parent=1 // pred_check_branch
      %128 = sbr.rel (0) target = $region33
    $region32: #{tpu_custom_call.1} parent=1 // pred_region
      %130 = dma.done [#allocation5], 16
    $region33: #{tpu_custom_call.1} parent=1 // pred_fallthru
      _
    %131 = vsyncpa [#allocation3], 1
    %132 = vsyncpa [#allocation5], 1

</llo_original>
